<compile_context>
chip_gen: v5e
topology: v5e:2x2
jax: 0.10.0
libtpu: 0.0.40
codegen_flags: <defaults>
</compile_context>

<pallas_src>
import jax
import jax.numpy as jnp
from jax.experimental import pallas as pl
from jax.experimental.pallas import tpu as pltpu


def _round_up(n, m):
    return ((n + m - 1) // m) * m


def _pick_bblk(B, Np):
    """Smallest divisor of B that makes the lane dim L = Bblk*Np >= 128."""
    for d in range(1, B + 1):
        if B % d == 0 and d * Np >= 128:
            return d
    return B


def _make_bndown_kernel(wp, L):
    """Kernel with pooled row width Wp and lane length L baked in (static shifts)."""
    taps = [(dy, dx) for dy in (-1, 0, 1) for dx in (-1, 0, 1)]

    def kernel(x_ref, w1_ref, w2_ref, s1_ref, b1_ref, s2_ref, b2_ref, m_ref, o_ref):
        pooled = x_ref[0].astype(jnp.float32)        # (Cin_p, L)
        masks = m_ref[...]                           # (9, 1, L) f32 {0,1}

        def im2col(a):
            # Stack the 9 tap slabs along the K axis.  Each tap is a static
            # lane-roll (XLU) of the flattened spatial axis; masks zero the
            # cross-row / cross-image / out-of-bounds lanes (padding=1).
            slabs = []
            for t, (dy, dx) in enumerate(taps):
                s = dy * wp + dx
                if s == 0:
                    slabs.append(a)                  # center tap: mask is all-ones
                else:
                    slabs.append(pltpu.roll(a, (-s) % L, axis=1) * masks[t])
            return jnp.concatenate(slabs, axis=0).astype(jnp.bfloat16)

        # Conv #1 (3x3, pad=1): one MXU matmul with K = 9*Cin_p.
        acc1 = jnp.dot(w1_ref[...], im2col(pooled),
                       preferred_element_type=jnp.float32)           # (Cmid_p, L)
        h = jnp.maximum(acc1 * s1_ref[...] + b1_ref[...], 0.0)       # BN + ReLU

        # Conv #2 (3x3, pad=1): one MXU matmul with K = 9*Cmid_p.
        acc2 = jnp.dot(w2_ref[...], im2col(h),
                       preferred_element_type=jnp.float32)           # (Cout, L)
        o_ref[0] = jnp.maximum(acc2 * s2_ref[...] + b2_ref[...],
                               0.0).astype(o_ref.dtype)

    return kernel


def bndown(x, w1, cb1, g1, be1, rm1, rv1, w2, cb2, g2, be2, rm2, rv2, eps=1e-5):
    """BNDown forward.  x: (B, Cin, H, W); conv weights in PyTorch OIHW layout."""
    B, Cin, H, W = x.shape
    Cmid = w1.shape[0]
    Cout = w2.shape[0]
    Hp, Wp = H // 2, W // 2
    Np = Hp * Wp

    Cin_p = _round_up(Cin, 8)
    Cmid_p = _round_up(Cmid, 8)
    Bblk = _pick_bblk(B, Np)
    Nb = B // Bblk
    L = Bblk * Np

    # MaxPool2d(2) in XLA; flatten pooled spatial dims.
    pooled = jax.lax.reduce_window(x, -jnp.inf, jax.lax.max,
                                   (1, 1, 2, 2), (1, 1, 2, 2), 'VALID')
    pooled = pooled.reshape(B, Cin, Np)
    if Cin_p != Cin:
        pooled = jnp.pad(pooled, ((0, 0), (0, Cin_p - Cin), (0, 0)))
    # Fold Bblk images into the lane axis: (Nb, Cin_p, Bblk*Np), bf16 for the MXU.
    pooled = (pooled.reshape(Nb, Bblk, Cin_p, Np)
              .transpose(0, 2, 1, 3).reshape(Nb, Cin_p, L)
              .astype(jnp.bfloat16))

    # Fused per-tap weights (tap-major, channel-minor K ordering), bf16.
    w1p = jnp.pad(w1, ((0, Cmid_p - Cmid), (0, Cin_p - Cin), (0, 0), (0, 0)))
    w2p = jnp.pad(w2, ((0, 0), (0, Cmid_p - Cmid), (0, 0), (0, 0)))
    w1f = jnp.transpose(w1p, (0, 2, 3, 1)).reshape(Cmid_p, 9 * Cin_p).astype(jnp.bfloat16)
    w2f = jnp.transpose(w2p, (0, 2, 3, 1)).reshape(Cout, 9 * Cmid_p).astype(jnp.bfloat16)

    # Fold conv bias + inference-mode BatchNorm into per-channel scale/bias.
    s1 = (g1 / jnp.sqrt(rv1 + eps)).astype(jnp.float32)
    bb1 = ((cb1 - rm1) * s1 + be1).astype(jnp.float32)
    s2 = (g2 / jnp.sqrt(rv2 + eps)).astype(jnp.float32)
    bb2 = ((cb2 - rm2) * s2 + be2).astype(jnp.float32)
    s1 = jnp.pad(s1, (0, Cmid_p - Cmid)).reshape(Cmid_p, 1)
    bb1 = jnp.pad(bb1, (0, Cmid_p - Cmid)).reshape(Cmid_p, 1)   # pad bias 0 -> ReLU keeps pad rows 0
    s2 = s2.reshape(Cout, 1)
    bb2 = bb2.reshape(Cout, 1)

    # Per-tap validity masks on the flattened spatial axis, tiled per image so
    # cross-image roll wraps are zeroed (implements padding=1).
    row = jnp.arange(Hp).reshape(Hp, 1)
    col = jnp.arange(Wp).reshape(1, Wp)
    mask_list = []
    for dy in (-1, 0, 1):
        for dx in (-1, 0, 1):
            m = ((row + dy >= 0) & (row + dy < Hp) &
                 (col + dx >= 0) & (col + dx < Wp)).reshape(Np)
            mask_list.append(jnp.tile(m, Bblk))
    masks = jnp.stack(mask_list, axis=0).reshape(9, 1, L).astype(jnp.float32)

    kernel = _make_bndown_kernel(Wp, L)

    flops = 2 * 9 * B * Np * (Cin * Cmid + Cmid * Cout)
    bytes_accessed = (pooled.size * 2 + w1f.size * 2 + w2f.size * 2
                      + masks.size * 4
                      + (s1.size + bb1.size + s2.size + bb2.size) * 4
                      + Nb * Cout * L * x.dtype.itemsize)

    out_flat = pl.pallas_call(
        kernel,
        out_shape=jax.ShapeDtypeStruct((Nb, Cout, L), x.dtype),
        grid_spec=pltpu.PrefetchScalarGridSpec(
            num_scalar_prefetch=0,
            grid=(Nb,),
            in_specs=[
                pl.BlockSpec((1, Cin_p, L), lambda b: (b, 0, 0)),
                pl.BlockSpec((Cmid_p, 9 * Cin_p), lambda b: (0, 0)),
                pl.BlockSpec((Cout, 9 * Cmid_p), lambda b: (0, 0)),
                pl.BlockSpec((Cmid_p, 1), lambda b: (0, 0)),
                pl.BlockSpec((Cmid_p, 1), lambda b: (0, 0)),
                pl.BlockSpec((Cout, 1), lambda b: (0, 0)),
                pl.BlockSpec((Cout, 1), lambda b: (0, 0)),
                pl.BlockSpec((9, 1, L), lambda b: (0, 0, 0)),
            ],
            out_specs=pl.BlockSpec((1, Cout, L), lambda b: (b, 0, 0)),
        ),
        compiler_params=pltpu.CompilerParams(
            dimension_semantics=("parallel",)),
        cost_estimate=pl.CostEstimate(
            flops=int(flops), transcendentals=0,
            bytes_accessed=int(bytes_accessed)),
    )(pooled, w1f, w2f, s1, bb1, s2, bb2, masks)

    # Unfold the batch images from the lane axis.
    out = out_flat.reshape(Nb, Cout, Bblk, Np).transpose(0, 2, 1, 3)
    return out.reshape(B, Cout, Hp, Wp)


def bndown_ref(x, w1, cb1, g1, be1, rm1, rv1, w2, cb2, g2, be2, rm2, rv2, eps=1e-5):
    """Pure-JAX reference matching the PyTorch forward (inference-mode BN)."""
    xp = jax.lax.reduce_window(x, -jnp.inf, jax.lax.max,
                               (1, 1, 2, 2), (1, 1, 2, 2), 'VALID')

    def conv(a, w, cb):
        y = jax.lax.conv_general_dilated(
            a, w, window_strides=(1, 1), padding='SAME',
            dimension_numbers=('NCHW', 'OIHW', 'NCHW'))
        return y + cb[None, :, None, None]

    def bn(a, g, b, mean, var):
        inv = 1.0 / jnp.sqrt(var + eps)
        return ((a - mean[None, :, None, None]) * inv[None, :, None, None]
                * g[None, :, None, None] + b[None, :, None, None])

    h = jax.nn.relu(bn(conv(xp, w1, cb1), g1, be1, rm1, rv1))
    return jax.nn.relu(bn(conv(h, w2, cb2), g2, be2, rm2, rv2))


if __name__ == "__main__":
    B, Cin, H, W = 2, 4, 16, 16
    Cout = 8
    Cmid = Cout   # BNDoubleConv default: mid_channels = out_channels

    key = jax.random.PRNGKey(0)
    ks = jax.random.split(key, 14)

    x = jax.random.normal(ks[0], (B, Cin, H, W), dtype=jnp.float32)

    bound1 = 1.0 / (Cin * 9) ** 0.5
    bound2 = 1.0 / (Cmid * 9) ** 0.5
    w1 = jax.random.uniform(ks[1], (Cmid, Cin, 3, 3), jnp.float32, -bound1, bound1)
    cb1 = jax.random.uniform(ks[2], (Cmid,), jnp.float32, -bound1, bound1)
    w2 = jax.random.uniform(ks[3], (Cout, Cmid, 3, 3), jnp.float32, -bound2, bound2)
    cb2 = jax.random.uniform(ks[4], (Cout,), jnp.float32, -bound2, bound2)

    g1 = jax.random.uniform(ks[5], (Cmid,), jnp.float32, 0.5, 1.5)
    be1 = jax.random.normal(ks[6], (Cmid,)) * 0.1
    rm1 = jax.random.normal(ks[7], (Cmid,)) * 0.1
    rv1 = jax.random.uniform(ks[8], (Cmid,), jnp.float32, 0.5, 1.5)

    g2 = jax.random.uniform(ks[9], (Cout,), jnp.float32, 0.5, 1.5)
    be2 = jax.random.normal(ks[10], (Cout,)) * 0.1
    rm2 = jax.random.normal(ks[11], (Cout,)) * 0.1
    rv2 = jax.random.uniform(ks[12], (Cout,), jnp.float32, 0.5, 1.5)

    out = bndown(x, w1, cb1, g1, be1, rm1, rv1, w2, cb2, g2, be2, rm2, rv2)
    out = jax.block_until_ready(out)

    ref = bndown_ref(x, w1, cb1, g1, be1, rm1, rv1, w2, cb2, g2, be2, rm2, rv2)
    assert out.shape == (B, Cout, H // 2, W // 2)
    # bf16 MXU inputs (f32 accumulation) -> loosened tolerance vs. the f32 reference.
    assert jnp.allclose(out, ref, atol=5e-2, rtol=5e-2), \
        float(jnp.max(jnp.abs(out - ref)))

    print("KERNEL_OK")
</pallas_src>

<mosaic_0001>
module attributes {stable_mosaic.version = 11 : i64} {
  func.func @kernel(%arg0: i32, %arg1: memref<1x8x128xbf16, #tpu.memory_space<vmem>>, %arg2: memref<8x72xbf16, #tpu.memory_space<vmem>>, %arg3: memref<8x72xbf16, #tpu.memory_space<vmem>>, %arg4: memref<8x1xf32, #tpu.memory_space<vmem>>, %arg5: memref<8x1xf32, #tpu.memory_space<vmem>>, %arg6: memref<8x1xf32, #tpu.memory_space<vmem>>, %arg7: memref<8x1xf32, #tpu.memory_space<vmem>>, %arg8: memref<9x1x128xf32, #tpu.memory_space<vmem>>, %arg9: memref<1x8x128xf32, #tpu.memory_space<vmem>>) attributes {dimension_semantics = [#tpu.dimension_semantics<parallel>], iteration_bounds = array<i64: 1>, scalar_prefetch = 0 : i64, scratch_operands = 0 : i64, tpu.core_type = #tpu.core_type<tc>, window_params = [{transform_indices = @transform_0, window_bounds = array<i64: 1, 8, 128>}, {pipeline_mode = #tpu.pipeline_mode<synchronous>, transform_indices = @transform_1, window_bounds = array<i64: 8, 72>}, {pipeline_mode = #tpu.pipeline_mode<synchronous>, transform_indices = @transform_2, window_bounds = array<i64: 8, 72>}, {pipeline_mode = #tpu.pipeline_mode<synchronous>, transform_indices = @transform_3, window_bounds = array<i64: 8, 1>}, {pipeline_mode = #tpu.pipeline_mode<synchronous>, transform_indices = @transform_4, window_bounds = array<i64: 8, 1>}, {pipeline_mode = #tpu.pipeline_mode<synchronous>, transform_indices = @transform_5, window_bounds = array<i64: 8, 1>}, {pipeline_mode = #tpu.pipeline_mode<synchronous>, transform_indices = @transform_6, window_bounds = array<i64: 8, 1>}, {pipeline_mode = #tpu.pipeline_mode<synchronous>, transform_indices = @transform_7, window_bounds = array<i64: 9, 1, 128>}, {transform_indices = @transform_8, window_bounds = array<i64: 1, 8, 128>}]} {
    %c0 = arith.constant 0 : index
    %c0_0 = arith.constant 0 : index
    %c0_1 = arith.constant 0 : index
    %0 = vector.load %arg1[%c0, %c0_0, %c0_1] : memref<1x8x128xbf16, #tpu.memory_space<vmem>>, vector<1x8x128xbf16>
    %1 = vector.shape_cast %0 : vector<1x8x128xbf16> to vector<8x128xbf16>
    %2 = arith.extf %1 : vector<8x128xbf16> to vector<8x128xf32>
    %c0_2 = arith.constant 0 : index
    %c0_3 = arith.constant 0 : index
    %c0_4 = arith.constant 0 : index
    %3 = vector.load %arg8[%c0_2, %c0_3, %c0_4] : memref<9x1x128xf32, #tpu.memory_space<vmem>>, vector<9x1x128xf32>
    %c0_5 = arith.constant 0 : index
    %c0_6 = arith.constant 0 : index
    %4 = vector.load %arg2[%c0_5, %c0_6] : memref<8x72xbf16, #tpu.memory_space<vmem>>, vector<8x72xbf16>
    %c9_i32 = arith.constant 9 : i32
    %5 = tpu.dynamic_rotate %2 by %c9_i32 dim 1 : vector<8x128xf32>, i32 -> vector<8x128xf32>
    %6 = vector.extract_strided_slice %3 {offsets = [0, 0, 0], sizes = [1, 1, 128], strides = [1, 1, 1]} : vector<9x1x128xf32> to vector<1x1x128xf32>
    %7 = vector.shape_cast %6 : vector<1x1x128xf32> to vector<1x128xf32>
    %8 = vector.broadcast %7 : vector<1x128xf32> to vector<8x128xf32>
    %9 = arith.mulf %5, %8 : vector<8x128xf32>
    %c8_i32 = arith.constant 8 : i32
    %10 = tpu.dynamic_rotate %2 by %c8_i32 dim 1 : vector<8x128xf32>, i32 -> vector<8x128xf32>
    %11 = vector.extract_strided_slice %3 {offsets = [1, 0, 0], sizes = [1, 1, 128], strides = [1, 1, 1]} : vector<9x1x128xf32> to vector<1x1x128xf32>
    %12 = vector.shape_cast %11 : vector<1x1x128xf32> to vector<1x128xf32>
    %13 = vector.broadcast %12 : vector<1x128xf32> to vector<8x128xf32>
    %14 = arith.mulf %10, %13 : vector<8x128xf32>
    %c7_i32 = arith.constant 7 : i32
    %15 = tpu.dynamic_rotate %2 by %c7_i32 dim 1 : vector<8x128xf32>, i32 -> vector<8x128xf32>
    %16 = vector.extract_strided_slice %3 {offsets = [2, 0, 0], sizes = [1, 1, 128], strides = [1, 1, 1]} : vector<9x1x128xf32> to vector<1x1x128xf32>
    %17 = vector.shape_cast %16 : vector<1x1x128xf32> to vector<1x128xf32>
    %18 = vector.broadcast %17 : vector<1x128xf32> to vector<8x128xf32>
    %19 = arith.mulf %15, %18 : vector<8x128xf32>
    %c1_i32 = arith.constant 1 : i32
    %20 = tpu.dynamic_rotate %2 by %c1_i32 dim 1 : vector<8x128xf32>, i32 -> vector<8x128xf32>
    %21 = vector.extract_strided_slice %3 {offsets = [3, 0, 0], sizes = [1, 1, 128], strides = [1, 1, 1]} : vector<9x1x128xf32> to vector<1x1x128xf32>
    %22 = vector.shape_cast %21 : vector<1x1x128xf32> to vector<1x128xf32>
    %23 = vector.broadcast %22 : vector<1x128xf32> to vector<8x128xf32>
    %24 = arith.mulf %20, %23 : vector<8x128xf32>
    %c127_i32 = arith.constant 127 : i32
    %25 = tpu.dynamic_rotate %2 by %c127_i32 dim 1 : vector<8x128xf32>, i32 -> vector<8x128xf32>
    %26 = vector.extract_strided_slice %3 {offsets = [5, 0, 0], sizes = [1, 1, 128], strides = [1, 1, 1]} : vector<9x1x128xf32> to vector<1x1x128xf32>
    %27 = vector.shape_cast %26 : vector<1x1x128xf32> to vector<1x128xf32>
    %28 = vector.broadcast %27 : vector<1x128xf32> to vector<8x128xf32>
    %29 = arith.mulf %25, %28 : vector<8x128xf32>
    %c121_i32 = arith.constant 121 : i32
    %30 = tpu.dynamic_rotate %2 by %c121_i32 dim 1 : vector<8x128xf32>, i32 -> vector<8x128xf32>
    %31 = vector.extract_strided_slice %3 {offsets = [6, 0, 0], sizes = [1, 1, 128], strides = [1, 1, 1]} : vector<9x1x128xf32> to vector<1x1x128xf32>
    %32 = vector.shape_cast %31 : vector<1x1x128xf32> to vector<1x128xf32>
    %33 = vector.broadcast %32 : vector<1x128xf32> to vector<8x128xf32>
    %34 = arith.mulf %30, %33 : vector<8x128xf32>
    %c120_i32 = arith.constant 120 : i32
    %35 = tpu.dynamic_rotate %2 by %c120_i32 dim 1 : vector<8x128xf32>, i32 -> vector<8x128xf32>
    %36 = vector.extract_strided_slice %3 {offsets = [7, 0, 0], sizes = [1, 1, 128], strides = [1, 1, 1]} : vector<9x1x128xf32> to vector<1x1x128xf32>
    %37 = vector.shape_cast %36 : vector<1x1x128xf32> to vector<1x128xf32>
    %38 = vector.broadcast %37 : vector<1x128xf32> to vector<8x128xf32>
    %39 = arith.mulf %35, %38 : vector<8x128xf32>
    %c119_i32 = arith.constant 119 : i32
    %40 = tpu.dynamic_rotate %2 by %c119_i32 dim 1 : vector<8x128xf32>, i32 -> vector<8x128xf32>
    %41 = vector.extract_strided_slice %3 {offsets = [8, 0, 0], sizes = [1, 1, 128], strides = [1, 1, 1]} : vector<9x1x128xf32> to vector<1x1x128xf32>
    %42 = vector.shape_cast %41 : vector<1x1x128xf32> to vector<1x128xf32>
    %43 = vector.broadcast %42 : vector<1x128xf32> to vector<8x128xf32>
    %44 = arith.mulf %40, %43 : vector<8x128xf32>
    %45 = tpu.concatenate %9, %14, %19, %24, %2, %29, %34, %39, %44 in 0 : vector<8x128xf32>, vector<8x128xf32>, vector<8x128xf32>, vector<8x128xf32>, vector<8x128xf32>, vector<8x128xf32>, vector<8x128xf32>, vector<8x128xf32>, vector<8x128xf32> -> vector<72x128xf32>
    %46 = arith.truncf %45 : vector<72x128xf32> to vector<72x128xbf16>
    %cst = arith.constant dense<0.000000e+00> : vector<8x128xf32>
    %47 = tpu.matmul %4, %46, %cst {dimension_numbers = #tpu.dot_dimension_numbers<[1], [0], [0], [1], [0, 0, 1, 1], [], []>} : vector<8x72xbf16>, vector<72x128xbf16>, vector<8x128xf32> -> vector<8x128xf32>
    %c0_7 = arith.constant 0 : index
    %c0_8 = arith.constant 0 : index
    %48 = vector.load %arg4[%c0_7, %c0_8] : memref<8x1xf32, #tpu.memory_space<vmem>>, vector<8x1xf32>
    %49 = vector.broadcast %48 : vector<8x1xf32> to vector<8x128xf32>
    %50 = arith.mulf %47, %49 : vector<8x128xf32>
    %c0_9 = arith.constant 0 : index
    %c0_10 = arith.constant 0 : index
    %51 = vector.load %arg5[%c0_9, %c0_10] : memref<8x1xf32, #tpu.memory_space<vmem>>, vector<8x1xf32>
    %52 = vector.broadcast %51 : vector<8x1xf32> to vector<8x128xf32>
    %53 = arith.addf %50, %52 : vector<8x128xf32>
    %cst_11 = arith.constant 0.000000e+00 : f32
    %54 = vector.broadcast %cst_11 : f32 to vector<8x128xf32>
    %55 = arith.maximumf %53, %54 : vector<8x128xf32>
    %c0_12 = arith.constant 0 : index
    %c0_13 = arith.constant 0 : index
    %56 = vector.load %arg3[%c0_12, %c0_13] : memref<8x72xbf16, #tpu.memory_space<vmem>>, vector<8x72xbf16>
    %c9_i32_14 = arith.constant 9 : i32
    %57 = tpu.dynamic_rotate %55 by %c9_i32_14 dim 1 : vector<8x128xf32>, i32 -> vector<8x128xf32>
    %58 = vector.extract_strided_slice %3 {offsets = [0, 0, 0], sizes = [1, 1, 128], strides = [1, 1, 1]} : vector<9x1x128xf32> to vector<1x1x128xf32>
    %59 = vector.shape_cast %58 : vector<1x1x128xf32> to vector<1x128xf32>
    %60 = vector.broadcast %59 : vector<1x128xf32> to vector<8x128xf32>
    %61 = arith.mulf %57, %60 : vector<8x128xf32>
    %c8_i32_15 = arith.constant 8 : i32
    %62 = tpu.dynamic_rotate %55 by %c8_i32_15 dim 1 : vector<8x128xf32>, i32 -> vector<8x128xf32>
    %63 = vector.extract_strided_slice %3 {offsets = [1, 0, 0], sizes = [1, 1, 128], strides = [1, 1, 1]} : vector<9x1x128xf32> to vector<1x1x128xf32>
    %64 = vector.shape_cast %63 : vector<1x1x128xf32> to vector<1x128xf32>
    %65 = vector.broadcast %64 : vector<1x128xf32> to vector<8x128xf32>
    %66 = arith.mulf %62, %65 : vector<8x128xf32>
    %c7_i32_16 = arith.constant 7 : i32
    %67 = tpu.dynamic_rotate %55 by %c7_i32_16 dim 1 : vector<8x128xf32>, i32 -> vector<8x128xf32>
    %68 = vector.extract_strided_slice %3 {offsets = [2, 0, 0], sizes = [1, 1, 128], strides = [1, 1, 1]} : vector<9x1x128xf32> to vector<1x1x128xf32>
    %69 = vector.shape_cast %68 : vector<1x1x128xf32> to vector<1x128xf32>
    %70 = vector.broadcast %69 : vector<1x128xf32> to vector<8x128xf32>
    %71 = arith.mulf %67, %70 : vector<8x128xf32>
    %c1_i32_17 = arith.constant 1 : i32
    %72 = tpu.dynamic_rotate %55 by %c1_i32_17 dim 1 : vector<8x128xf32>, i32 -> vector<8x128xf32>
    %73 = vector.extract_strided_slice %3 {offsets = [3, 0, 0], sizes = [1, 1, 128], strides = [1, 1, 1]} : vector<9x1x128xf32> to vector<1x1x128xf32>
    %74 = vector.shape_cast %73 : vector<1x1x128xf32> to vector<1x128xf32>
    %75 = vector.broadcast %74 : vector<1x128xf32> to vector<8x128xf32>
    %76 = arith.mulf %72, %75 : vector<8x128xf32>
    %c127_i32_18 = arith.constant 127 : i32
    %77 = tpu.dynamic_rotate %55 by %c127_i32_18 dim 1 : vector<8x128xf32>, i32 -> vector<8x128xf32>
    %78 = vector.extract_strided_slice %3 {offsets = [5, 0, 0], sizes = [1, 1, 128], strides = [1, 1, 1]} : vector<9x1x128xf32> to vector<1x1x128xf32>
    %79 = vector.shape_cast %78 : vector<1x1x128xf32> to vector<1x128xf32>
    %80 = vector.broadcast %79 : vector<1x128xf32> to vector<8x128xf32>
    %81 = arith.mulf %77, %80 : vector<8x128xf32>
    %c121_i32_19 = arith.constant 121 : i32
    %82 = tpu.dynamic_rotate %55 by %c121_i32_19 dim 1 : vector<8x128xf32>, i32 -> vector<8x128xf32>
    %83 = vector.extract_strided_slice %3 {offsets = [6, 0, 0], sizes = [1, 1, 128], strides = [1, 1, 1]} : vector<9x1x128xf32> to vector<1x1x128xf32>
    %84 = vector.shape_cast %83 : vector<1x1x128xf32> to vector<1x128xf32>
    %85 = vector.broadcast %84 : vector<1x128xf32> to vector<8x128xf32>
    %86 = arith.mulf %82, %85 : vector<8x128xf32>
    %c120_i32_20 = arith.constant 120 : i32
    %87 = tpu.dynamic_rotate %55 by %c120_i32_20 dim 1 : vector<8x128xf32>, i32 -> vector<8x128xf32>
    %88 = vector.extract_strided_slice %3 {offsets = [7, 0, 0], sizes = [1, 1, 128], strides = [1, 1, 1]} : vector<9x1x128xf32> to vector<1x1x128xf32>
    %89 = vector.shape_cast %88 : vector<1x1x128xf32> to vector<1x128xf32>
    %90 = vector.broadcast %89 : vector<1x128xf32> to vector<8x128xf32>
    %91 = arith.mulf %87, %90 : vector<8x128xf32>
    %c119_i32_21 = arith.constant 119 : i32
    %92 = tpu.dynamic_rotate %55 by %c119_i32_21 dim 1 : vector<8x128xf32>, i32 -> vector<8x128xf32>
    %93 = vector.extract_strided_slice %3 {offsets = [8, 0, 0], sizes = [1, 1, 128], strides = [1, 1, 1]} : vector<9x1x128xf32> to vector<1x1x128xf32>
    %94 = vector.shape_cast %93 : vector<1x1x128xf32> to vector<1x128xf32>
    %95 = vector.broadcast %94 : vector<1x128xf32> to vector<8x128xf32>
    %96 = arith.mulf %92, %95 : vector<8x128xf32>
    %97 = tpu.concatenate %61, %66, %71, %76, %55, %81, %86, %91, %96 in 0 : vector<8x128xf32>, vector<8x128xf32>, vector<8x128xf32>, vector<8x128xf32>, vector<8x128xf32>, vector<8x128xf32>, vector<8x128xf32>, vector<8x128xf32>, vector<8x128xf32> -> vector<72x128xf32>
    %98 = arith.truncf %97 : vector<72x128xf32> to vector<72x128xbf16>
    %cst_22 = arith.constant dense<0.000000e+00> : vector<8x128xf32>
    %99 = tpu.matmul %56, %98, %cst_22 {dimension_numbers = #tpu.dot_dimension_numbers<[1], [0], [0], [1], [0, 0, 1, 1], [], []>} : vector<8x72xbf16>, vector<72x128xbf16>, vector<8x128xf32> -> vector<8x128xf32>
    %c0_23 = arith.constant 0 : index
    %c0_24 = arith.constant 0 : index
    %100 = vector.load %arg6[%c0_23, %c0_24] : memref<8x1xf32, #tpu.memory_space<vmem>>, vector<8x1xf32>
    %101 = vector.broadcast %100 : vector<8x1xf32> to vector<8x128xf32>
    %102 = arith.mulf %99, %101 : vector<8x128xf32>
    %c0_25 = arith.constant 0 : index
    %c0_26 = arith.constant 0 : index
    %103 = vector.load %arg7[%c0_25, %c0_26] : memref<8x1xf32, #tpu.memory_space<vmem>>, vector<8x1xf32>
    %104 = vector.broadcast %103 : vector<8x1xf32> to vector<8x128xf32>
    %105 = arith.addf %102, %104 : vector<8x128xf32>
    %cst_27 = arith.constant 0.000000e+00 : f32
    %106 = vector.broadcast %cst_27 : f32 to vector<8x128xf32>
    %107 = arith.maximumf %105, %106 : vector<8x128xf32>
    %c0_28 = arith.constant 0 : index
    %c0_29 = arith.constant 0 : index
    %c0_30 = arith.constant 0 : index
    %108 = vector.load %arg9[%c0_28, %c0_29, %c0_30] : memref<1x8x128xf32, #tpu.memory_space<vmem>>, vector<1x8x128xf32>
    %109 = vector.shape_cast %108 : vector<1x8x128xf32> to vector<8x128xf32>
    %110 = vector.shape_cast %107 : vector<8x128xf32> to vector<1x8x128xf32>
    tpu.vector_store %arg9[%c0_28, %c0_29, %c0_30], %110 {strides = array<i32>} : memref<1x8x128xf32, #tpu.memory_space<vmem>>, vector<1x8x128xf32>,
    return
  }
  func.func @transform_0(%arg0: i32) -> (i32, i32, i32) {
    %c0_i32 = arith.constant 0 : i32
    %c0_i32_0 = arith.constant 0 : i32
    %c0_i32_1 = arith.constant 0 : i32
    return %arg0, %c0_i32, %c0_i32_0 : i32, i32, i32
  }
  func.func @transform_1(%arg0: i32) -> (i32, i32) {
    %c0_i32 = arith.constant 0 : i32
    %c0_i32_0 = arith.constant 0 : i32
    %c0_i32_1 = arith.constant 0 : i32
    return %c0_i32, %c0_i32_0 : i32, i32
  }
  func.func @transform_2(%arg0: i32) -> (i32, i32) {
    %c0_i32 = arith.constant 0 : i32
    %c0_i32_0 = arith.constant 0 : i32
    %c0_i32_1 = arith.constant 0 : i32
    return %c0_i32, %c0_i32_0 : i32, i32
  }
  func.func @transform_3(%arg0: i32) -> (i32, i32) {
    %c0_i32 = arith.constant 0 : i32
    %c0_i32_0 = arith.constant 0 : i32
    %c0_i32_1 = arith.constant 0 : i32
    return %c0_i32, %c0_i32_0 : i32, i32
  }
  func.func @transform_4(%arg0: i32) -> (i32, i32) {
    %c0_i32 = arith.constant 0 : i32
    %c0_i32_0 = arith.constant 0 : i32
    %c0_i32_1 = arith.constant 0 : i32
    return %c0_i32, %c0_i32_0 : i32, i32
  }
  func.func @transform_5(%arg0: i32) -> (i32, i32) {
    %c0_i32 = arith.constant 0 : i32
    %c0_i32_0 = arith.constant 0 : i32
    %c0_i32_1 = arith.constant 0 : i32
    return %c0_i32, %c0_i32_0 : i32, i32
  }
  func.func @transform_6(%arg0: i32) -> (i32, i32) {
    %c0_i32 = arith.constant 0 : i32
    %c0_i32_0 = arith.constant 0 : i32
    %c0_i32_1 = arith.constant 0 : i32
    return %c0_i32, %c0_i32_0 : i32, i32
  }
  func.func @transform_7(%arg0: i32) -> (i32, i32, i32) {
    %c0_i32 = arith.constant 0 : i32
    %c0_i32_0 = arith.constant 0 : i32
    %c0_i32_1 = arith.constant 0 : i32
    %c0_i32_2 = arith.constant 0 : i32
    return %c0_i32, %c0_i32_0, %c0_i32_1 : i32, i32, i32
  }
  func.func @transform_8(%arg0: i32) -> (i32, i32, i32) {
    %c0_i32 = arith.constant 0 : i32
    %c0_i32_0 = arith.constant 0 : i32
    %c0_i32_1 = arith.constant 0 : i32
    return %arg0, %c0_i32, %c0_i32_0 : i32, i32, i32
  }
}

</mosaic_0001>

<llo_original>
// kernel: tpu_custom_call.1
$region0: #{tpu_custom_call.1}
  #allocation0 [shape = 'u32[]', space=smem, size = 0x4, offset = 0x4, fixed_abs, tag = 'smem constant byte address 0x4 - core index']
  #allocation1 [shape = 'u32[72,128]{1,0:T(1,128)}', space=vmem, size = 0x9000, scoped, tag = 'internal scratch']
  %s0 = inlined_call_operand.vmem [shape: bf16[1,8,128], index: 0, kind: input, shape index: {}]
  %s1 = inlined_call_operand.vmem [shape: bf16[8,72], index: 1, kind: input, shape index: {}]
  %s2 = inlined_call_operand.vmem [shape: bf16[8,72], index: 2, kind: input, shape index: {}]
  %s3 = inlined_call_operand.vmem [shape: f32[8,1], index: 3, kind: input, shape index: {}]
  %s4 = inlined_call_operand.vmem [shape: f32[8,1], index: 4, kind: input, shape index: {}]
  %s5 = inlined_call_operand.vmem [shape: f32[8,1], index: 5, kind: input, shape index: {}]
  %s6 = inlined_call_operand.vmem [shape: f32[8,1], index: 6, kind: input, shape index: {}]
  %s7 = inlined_call_operand.vmem [shape: f32[9,1,128], index: 7, kind: input, shape index: {}]
  %s8 = inlined_call_operand.hbm [shape: f32[1,8,128], index: 8, kind: output, shape index: {}]
  %s9 = sld [smem:[#allocation0]]
  $region42: #{tpu_custom_call.1} parent=0
    _
  %s11 = ssub.s32 1, %s9
  %s12 = scalar_select 0, %s11, %s9
  $region1: #{tpu_custom_call.1} parent=0
    #allocation2 [shape = 'u8[4096]{0}', space=vmem, size = 0x1000, scoped, tag = 'output window, operand 0, single buffered']
    #allocation3 [shape = 's32[1]{0}', space=sflag, size = 0x4, scoped, tag = 'scoped memory for tpu_custom_call.1']
    %13 = vsyncpa [#allocation3], 0
    // Predicated region
    $region2: #{tpu_custom_call.1} parent=1 // pred_check
      _
    $region3: #{tpu_custom_call.1} parent=1 // pred_check_branch
      %15 = sbr.rel (0) target = $region5
    $region4: #{tpu_custom_call.1} parent=1 // pred_region
      _
    $region5: #{tpu_custom_call.1} parent=1 // pred_fallthru
      _
    // Predicated region
    $region6: #{tpu_custom_call.1} parent=1 // pred_check
      _
    $region7: #{tpu_custom_call.1} parent=1 // pred_check_branch
      %17 = sbr.rel (0) target = $region9
    $region8: #{tpu_custom_call.1} parent=1 // pred_region
      _
    $region9: #{tpu_custom_call.1} parent=1 // pred_fallthru
      _
    // Predicated region
    $region10: #{tpu_custom_call.1} parent=1 // pred_check
      _
    $region11: #{tpu_custom_call.1} parent=1 // pred_check_branch
      %19 = sbr.rel (0) target = $region13
    $region12: #{tpu_custom_call.1} parent=1 // pred_region
      _
    $region13: #{tpu_custom_call.1} parent=1 // pred_fallthru
      _
    // Predicated region
    $region14: #{tpu_custom_call.1} parent=1 // pred_check
      _
    $region15: #{tpu_custom_call.1} parent=1 // pred_check_branch
      %21 = sbr.rel (0) target = $region17
    $region16: #{tpu_custom_call.1} parent=1 // pred_region
      _
    $region17: #{tpu_custom_call.1} parent=1 // pred_fallthru
      _
    // Predicated region
    $region18: #{tpu_custom_call.1} parent=1 // pred_check
      _
    $region19: #{tpu_custom_call.1} parent=1 // pred_check_branch
      %23 = sbr.rel (0) target = $region21
    $region20: #{tpu_custom_call.1} parent=1 // pred_region
      _
    $region21: #{tpu_custom_call.1} parent=1 // pred_fallthru
      _
    // Predicated region
    $region22: #{tpu_custom_call.1} parent=1 // pred_check
      _
    $region23: #{tpu_custom_call.1} parent=1 // pred_check_branch
      %25 = sbr.rel (0) target = $region25
    $region24: #{tpu_custom_call.1} parent=1 // pred_region
      _
    $region25: #{tpu_custom_call.1} parent=1 // pred_fallthru
      _
    // Predicated region
    $region26: #{tpu_custom_call.1} parent=1 // pred_check
      _
    $region27: #{tpu_custom_call.1} parent=1 // pred_check_branch
      %27 = sbr.rel (0) target = $region29
    $region28: #{tpu_custom_call.1} parent=1 // pred_region
      _
    $region29: #{tpu_custom_call.1} parent=1 // pred_fallthru
      _
    // Predicated region
    $region30: #{tpu_custom_call.1} parent=1 // pred_check
      _
    $region31: #{tpu_custom_call.1} parent=1 // pred_check_branch
      %29 = sbr.rel (0) target = $region33
    $region32: #{tpu_custom_call.1} parent=1 // pred_region
      _
    $region33: #{tpu_custom_call.1} parent=1 // pred_fallthru
      _
    %v31 = vld [vmem:[%s0] sm:$0xf]
    %v32 = vunpack.c.l.bf16 %v31
    %v33 = vld [vmem:[%s7] sm:$0x1]
    %v34 = vld [vmem:[%s7 + $0x1] sm:$0x1]
    %v35 = vld [vmem:[%s7 + $0x2] sm:$0x1]
    %v36 = vld [vmem:[%s7 + $0x3] sm:$0x1]
    %v37 = vld [vmem:[%s7 + $0x5] sm:$0x1]
    %v38 = vld [vmem:[%s7 + $0x6] sm:$0x1]
    %v39 = vld [vmem:[%s7 + $0x7] sm:$0x1]
    %v40 = vld [vmem:[%s7 + $0x8] sm:$0x1]
    %v41 = vld [vmem:[%s1] sm:$0xf]
    %42 = vrot.lane.b32.xlu0 %v32, 9
    %v43 = vpop.permute.xlu0 %42
    %v45 = vperm.slane %v33, 0
    %v47 = vmul.f32 %v43, %v45
    %48 = vrot.lane.b32.xlu0 %v32, 8
    %v49 = vpop.permute.xlu0 %48
    %v51 = vperm.slane %v34, 0
    %v53 = vmul.f32 %v49, %v51
    %54 = vrot.lane.b32.xlu0 %v32, 7
    %v55 = vpop.permute.xlu0 %54
    %v57 = vperm.slane %v35, 0
    %v59 = vmul.f32 %v55, %v57
    %60 = vrot.lane.b32.xlu0 %v32, 1
    %v61 = vpop.permute.xlu0 %60
    %v63 = vperm.slane %v36, 0
    %v65 = vmul.f32 %v61, %v63
    %66 = vrot.lane.b32.xlu0 %v32, 127
    %v67 = vpop.permute.xlu0 %66
    %v69 = vperm.slane %v37, 0
    %v71 = vmul.f32 %v67, %v69
    %72 = vrot.lane.b32.xlu0 %v32, 121
    %v73 = vpop.permute.xlu0 %72
    %v75 = vperm.slane %v38, 0
    %v77 = vmul.f32 %v73, %v75
    %78 = vrot.lane.b32.xlu0 %v32, 120
    %v79 = vpop.permute.xlu0 %78
    %v81 = vperm.slane %v39, 0
    %v83 = vmul.f32 %v79, %v81
    %84 = vrot.lane.b32.xlu0 %v32, 119
    %v85 = vpop.permute.xlu0 %84
    %v87 = vperm.slane %v40, 0
    %v89 = vmul.f32 %v85, %v87
    %v90 = vpack.c.bf16 %v53, %v47
    %v91 = vpack.c.bf16 %v65, %v59
    %v92 = vpack.c.bf16 %v71, %v32
    %v93 = vpack.c.bf16 %v83, %v77
    %v94 = vpack.c.bf16 %v89, %v89
    %vm95 = vcmask 588800
    %v97 = vsel %vm95, %v41, 0
    %vm99 = vcmask 1043456
    %v101 = vsel %vm99, %v94, 0
    %103 = vmatpush.bf16.msra.mxu0 0
    %104 = vmatpush.bf16.msra.mxu0 0
    %105 = vmatpush.bf16.msra.mxu0 0
    %106 = vmatpush.bf16.msra.mxu0 %v101
    %107 = vmatpush.bf16.msra.mxu0 %v93
    %108 = vmatpush.bf16.msra.mxu0 %v92
    %109 = vmatpush.bf16.msra.mxu0 %v91
    %110 = vmatpush.bf16.msra.mxu0 %v90
    %111 = vmatmul.bf16.gmra.mxu0 %v97
    %v112 = vpop.f32.mrf.mxu0
    %v113 = vadd.f32 0.0, %v112
    %v114 = vpop.f32.mrf.mxu0
    %115 = vdwg.mxu0
    %v116 = vld [vmem:[%s3] sm:$0xff]
    %118 = vset.pattern.permute.xlu0 0
    %119 = vperm.xlu0 %118, %v116
    %v120 = vpop.permute.xlu0 %119
    %v122 = vmul.f32 %v113, %v120
    %v123 = vld [vmem:[%s4] sm:$0xff]
    %125 = vset.pattern.permute.xlu0 0
    %126 = vperm.xlu0 %125, %v123
    %v127 = vpop.permute.xlu0 %126
    %v129 = vadd.f32 %v122, %v127
    %v130 = vmax.f32 %v129, 0.0
    %v131 = vld [vmem:[%s2] sm:$0xf]
    %132 = vrot.lane.b32.xlu0 %v130, 9
    %v133 = vpop.permute.xlu0 %132
    %v134 = vmul.f32 %v133, %v45
    %135 = vrot.lane.b32.xlu0 %v130, 8
    %v136 = vpop.permute.xlu0 %135
    %v137 = vmul.f32 %v136, %v51
    %138 = vrot.lane.b32.xlu0 %v130, 7
    %v139 = vpop.permute.xlu0 %138
    %v140 = vmul.f32 %v139, %v57
    %141 = vrot.lane.b32.xlu0 %v130, 1
    %v142 = vpop.permute.xlu0 %141
    %v143 = vmul.f32 %v142, %v63
    %144 = vrot.lane.b32.xlu0 %v130, 127
    %v145 = vpop.permute.xlu0 %144
    %v146 = vmul.f32 %v145, %v69
    %147 = vrot.lane.b32.xlu0 %v130, 121
    %v148 = vpop.permute.xlu0 %147
    %v149 = vmul.f32 %v148, %v75
    %150 = vrot.lane.b32.xlu0 %v130, 120
    %v151 = vpop.permute.xlu0 %150
    %v152 = vmul.f32 %v151, %v81
    %153 = vrot.lane.b32.xlu0 %v130, 119
    %v154 = vpop.permute.xlu0 %153
    %v155 = vmul.f32 %v154, %v87
    %v156 = vpack.c.bf16 %v137, %v134
    %v157 = vpack.c.bf16 %v143, %v140
    %v158 = vpack.c.bf16 %v146, %v130
    %v159 = vpack.c.bf16 %v152, %v149
    %v160 = vpack.c.bf16 %v155, %v155
    %v162 = vsel %vm95, %v131, 0
    %v165 = vsel %vm99, %v160, 0
    %167 = vmatpush.bf16.msra.mxu0 0
    %168 = vmatpush.bf16.msra.mxu0 0
    %169 = vmatpush.bf16.msra.mxu0 0
    %170 = vmatpush.bf16.msra.mxu0 %v165
    %171 = vmatpush.bf16.msra.mxu0 %v159
    %172 = vmatpush.bf16.msra.mxu0 %v158
    %173 = vmatpush.bf16.msra.mxu0 %v157
    %174 = vmatpush.bf16.msra.mxu0 %v156
    %175 = vmatmul.bf16.gmra.mxu0 %v162
    %v176 = vpop.f32.mrf.mxu0
    %v177 = vadd.f32 0.0, %v176
    %v178 = vpop.f32.mrf.mxu0
    %179 = vdwg.mxu0
    %v180 = vld [vmem:[%s5] sm:$0xff]
    %182 = vset.pattern.permute.xlu0 0
    %183 = vperm.xlu0 %182, %v180
    %v184 = vpop.permute.xlu0 %183
    %v186 = vmul.f32 %v177, %v184
    %v187 = vld [vmem:[%s6] sm:$0xff]
    %189 = vset.pattern.permute.xlu0 0
    %190 = vperm.xlu0 %189, %v187
    %v191 = vpop.permute.xlu0 %190
    %v193 = vadd.f32 %v186, %v191
    %v194 = vmax.f32 %v193, 0.0
    %195 = vst [vmem:[#allocation2] sm:$0xff] %v194
    // Predicated region
    $region34: #{tpu_custom_call.1} parent=1 // pred_check
      _
    $region35: #{tpu_custom_call.1} parent=1 // pred_check_branch
      %197 = sbr.rel (0) target = $region37
    $region36: #{tpu_custom_call.1} parent=1 // pred_region
      %199 = vsyncadd [#allocation3], 0
      %s201 = sshll.u32 [#allocation2], 4
      %s202 = int_to_ptr.vmem [resolvable:$true] %s201
      %s203 = sshll.u32 %s8, 4
      %s204 = int_to_ptr.hbm [resolvable:$true] %s203
      %206 = dma.vmem_to_hbm [thread:$0]  %s202, 128, %s204, [#allocation3]
    $region37: #{tpu_custom_call.1} parent=1 // pred_fallthru
      _
    // Predicated region
    $region38: #{tpu_custom_call.1} parent=1 // pred_check
      _
    $region39: #{tpu_custom_call.1} parent=1 // pred_check_branch
      %208 = sbr.rel (0) target = $region41
    $region40: #{tpu_custom_call.1} parent=1 // pred_region
      %210 = dma.done [#allocation3], 128
    $region41: #{tpu_custom_call.1} parent=1 // pred_fallthru
      _
    %211 = vsyncpa [#allocation3], 1

</llo_original>
